<compile_context>
chip_gen: v7x
topology: tpu7x:2x2x1
jax: 0.10.0
libtpu: 0.0.40
codegen_flags: <defaults>
</compile_context>

<pallas_src>
import functools
import math

import jax
import jax.numpy as jnp
from jax.experimental import pallas as pl
from jax.experimental.pallas import tpu as pltpu

_LANE = 128
_SUBLANE = 8


def _round_up(x, m):
    return (x + m - 1) // m * m


def _vmem_budget():
    """Generation-aware VMEM planning (v5e/v6e: 128 MiB, v7x: 64 MiB/TC)."""
    cap = 128 * 1024 * 1024
    try:
        info = pltpu.get_tpu_info()
        cap = int(getattr(info, "vmem_capacity_bytes", cap))
    except Exception:
        pass
    vmem_limit = min(cap * 3 // 4, 96 * 1024 * 1024)     # scoped limit we request
    block_budget = min(cap * 2 // 5, 40 * 1024 * 1024)   # live buffers we plan for
    return vmem_limit, block_budget


def _pick_rows(NG, step, budget_bytes, bytes_per_row):
    """Largest row-block R (multiple of `step`, divisor of NG, or NG itself)
    whose live VMEM fits the budget; prefer >=2 grid steps so work pipelines
    and shards across both TensorCores on v7x."""
    cands = sorted({r for r in range(step, NG + 1, step) if NG % r == 0} | {NG})
    fitting = [r for r in cands if r * bytes_per_row <= budget_bytes]
    if not fitting:
        return None
    multi = [r for r in fitting if NG // r >= 2]
    return max(multi) if multi else max(fitting)


def group_norm_ref(x, gamma, beta, G, eps=1e-5):
    """Pure-JAX reference mirroring the PyTorch function (f32 math)."""
    N, C, H, W = x.shape
    xr = x.astype(jnp.float32).reshape(N, G, C // G, H, W)
    mean = xr.mean(axis=(2, 3, 4), keepdims=True)
    var = ((xr - mean) ** 2).mean(axis=(2, 3, 4), keepdims=True)
    xn = ((xr - mean) / jnp.sqrt(var + eps)).reshape(N, C, H, W)
    y = xn * gamma.astype(jnp.float32) + beta.astype(jnp.float32)
    return y.astype(x.dtype)


def _gn_rows_kernel(x_ref, g_ref, b_ref, o_ref, *, eps, inv_n):
    # x block: (R, Lp); one row == one (n, g) group, lane-dense.
    x = x_ref[...].astype(jnp.float32)
    s1 = jnp.sum(x, axis=-1, keepdims=True)          # (R, 1)
    s2 = jnp.sum(x * x, axis=-1, keepdims=True)      # (R, 1)
    mean = s1 * inv_n
    var = jnp.maximum(s2 * inv_n - mean * mean, 0.0)  # clamp: 1-pass var can go <0
    inv = jax.lax.rsqrt(var + eps)                    # EUP rsqrt
    o_ref[...] = ((x - mean) * inv * g_ref[...] + b_ref[...]).astype(o_ref.dtype)


def _gn_chan_kernel(x_ref, g_ref, b_ref, o_ref, *, eps, inv_n):
    # x block: (R, Cg, HW); row r == one (n, g) group; params (R, Cg, 1) f32.
    x = x_ref[...].astype(jnp.float32)
    s1 = jnp.sum(jnp.sum(x, axis=2, keepdims=True), axis=1, keepdims=True)      # (R,1,1)
    s2 = jnp.sum(jnp.sum(x * x, axis=2, keepdims=True), axis=1, keepdims=True)  # (R,1,1)
    mean = s1 * inv_n
    var = jnp.maximum(s2 * inv_n - mean * mean, 0.0)
    inv = jax.lax.rsqrt(var + eps)
    o_ref[...] = ((x - mean) * inv * g_ref[...] + b_ref[...]).astype(o_ref.dtype)


def group_norm_pallas(x, gamma, beta, G, eps=1e-5):
    """x: (N, C, H, W); gamma/beta: (1, C, 1, 1). Returns (N, C, H, W)."""
    N, C, H, W = x.shape
    assert C % G == 0
    Cg = C // G
    HW = H * W
    NG = N * G
    isz = jnp.dtype(x.dtype).itemsize
    vmem_limit, budget = _vmem_budget()

    gamma_gc = gamma.reshape(G, Cg).astype(jnp.float32)
    beta_gc = beta.reshape(G, Cg).astype(jnp.float32)

    cp = pltpu.CompilerParams(
        dimension_semantics=("parallel",),
        vmem_limit_bytes=int(vmem_limit),
    )

    if Cg % _SUBLANE == 0:
        # ---- Channel-sublane path: x viewed (NG, Cg, HW); compact per-channel
        # params -> no (R, Cg*HW) gamma/beta tiles in VMEM or HBM. ----
        HW_pad = _round_up(HW, _LANE)  # VMEM lane padding only (no HBM pad)
        # 2x dbl-buffered x + 2x dbl-buffered out + 2 small param blocks (dbl-buf).
        bytes_per_row = Cg * (4 * HW_pad * isz + 4 * _LANE * 4)
        R = _pick_rows(NG, 1, budget, bytes_per_row)
        if R is not None:
            x3 = x.reshape(NG, Cg, HW)
            g_rows = jnp.tile(gamma_gc, (N, 1)).reshape(NG, Cg, 1)  # tiny: NG*Cg f32
            b_rows = jnp.tile(beta_gc, (N, 1)).reshape(NG, Cg, 1)
            kernel = functools.partial(
                _gn_chan_kernel, eps=float(eps), inv_n=1.0 / float(Cg * HW))
            out = pl.pallas_call(
                kernel,
                out_shape=jax.ShapeDtypeStruct((NG, Cg, HW), x.dtype),
                grid=(NG // R,),
                in_specs=[
                    pl.BlockSpec((R, Cg, HW), lambda i: (i, 0, 0)),
                    pl.BlockSpec((R, Cg, 1), lambda i: (i, 0, 0)),
                    pl.BlockSpec((R, Cg, 1), lambda i: (i, 0, 0)),
                ],
                out_specs=pl.BlockSpec((R, Cg, HW), lambda i: (i, 0, 0)),
                compiler_params=cp,
            )(x3, g_rows, b_rows)
            return out.reshape(N, C, H, W)
    else:
        # ---- Lane-dense row path: x viewed (NG, Cg*HW), padded to a lane
        # multiple so every store is unmasked; small resident gamma/beta tiles
        # (counted in the VMEM budget). ----
        L = Cg * HW
        Lp = _round_up(L, _LANE)
        step = (G * _SUBLANE) // math.gcd(G, _SUBLANE)  # sublane-dense & group-aligned
        # 2x dbl-buf x (isz) + 2x dbl-buf out (isz) + 2 resident f32 param tiles (x2 alloc).
        bytes_per_row = Lp * (4 * isz + 4 * 4)
        R = _pick_rows(NG, step, budget, bytes_per_row)
        if R is not None:
            x2 = x.reshape(NG, L)
            if Lp != L:
                x2 = jnp.pad(x2, ((0, 0), (0, Lp - L)))  # zeros drop out of s1/s2
            g_rows = jnp.broadcast_to(gamma_gc[:, :, None], (G, Cg, HW)).reshape(G, L)
            b_rows = jnp.broadcast_to(beta_gc[:, :, None], (G, Cg, HW)).reshape(G, L)
            if Lp != L:
                g_rows = jnp.pad(g_rows, ((0, 0), (0, Lp - L)))
                b_rows = jnp.pad(b_rows, ((0, 0), (0, Lp - L)))
            g_tile = jnp.tile(g_rows, (R // G, 1))  # (R, Lp), fetched once
            b_tile = jnp.tile(b_rows, (R // G, 1))  # (R, Lp), fetched once
            kernel = functools.partial(
                _gn_rows_kernel, eps=float(eps), inv_n=1.0 / float(L))
            out = pl.pallas_call(
                kernel,
                out_shape=jax.ShapeDtypeStruct((NG, Lp), x.dtype),
                grid=(NG // R,),
                in_specs=[
                    pl.BlockSpec((R, Lp), lambda i: (i, 0)),
                    pl.BlockSpec((R, Lp), lambda i: (0, 0)),  # resident, fetched once
                    pl.BlockSpec((R, Lp), lambda i: (0, 0)),  # resident, fetched once
                ],
                out_specs=pl.BlockSpec((R, Lp), lambda i: (i, 0)),
                compiler_params=cp,
            )(x2, g_tile, b_tile)
            if Lp != L:
                out = out[:, :L]
            return out.reshape(N, C, H, W)

    # TODO(synk): replace with a two-pass Pallas path for groups that do not fit
    # a single VMEM block (stats pass + fused apply pass).
    return group_norm_ref(x, gamma, beta, G, eps)


if __name__ == "__main__":
    key = jax.random.PRNGKey(0)
    k1, k2, k3, k4 = jax.random.split(key, 4)

    # 1) Module-default shapes (gamma=ones, beta=zeros): lane-dense row path.
    N, C, H, W, G = 2, 4, 16, 16, 2
    x = jax.random.normal(k1, (N, C, H, W), dtype=jnp.float32)
    gamma = jnp.ones((1, C, 1, 1), jnp.float32)
    beta = jnp.zeros((1, C, 1, 1), jnp.float32)
    y = jax.block_until_ready(group_norm_pallas(x, gamma, beta, G, eps=1e-5))
    y_ref = group_norm_ref(x, gamma, beta, G, eps=1e-5)
    assert y.shape == (N, C, H, W)
    assert jnp.allclose(y, y_ref, atol=1e-4, rtol=1e-4), "mismatch vs reference"

    # 2) Odd spatial size (exercises the lane-pad path) + non-trivial affine.
    N2, C2, H2, W2, G2 = 2, 6, 7, 7, 3
    x2 = jax.random.normal(k2, (N2, C2, H2, W2), dtype=jnp.float32)
    gamma2 = 0.5 + jax.random.uniform(k3, (1, C2, 1, 1), dtype=jnp.float32)
    beta2 = 0.1 * jax.random.normal(k4, (1, C2, 1, 1), dtype=jnp.float32)
    y2 = jax.block_until_ready(group_norm_pallas(x2, gamma2, beta2, G2, eps=1e-5))
    y2_ref = group_norm_ref(x2, gamma2, beta2, G2, eps=1e-5)
    assert jnp.allclose(y2, y2_ref, atol=1e-4, rtol=1e-4), "mismatch (odd HW)"

    # 3) Channel-sublane path (Cg % 8 == 0): compact per-channel params, bf16
    #    input, multi-step grid (>=2 blocks).
    N3, C3, H3, W3, G3 = 2, 64, 16, 16, 8
    x3 = jax.random.normal(k2, (N3, C3, H3, W3), dtype=jnp.float32).astype(jnp.bfloat16)
    gamma3 = 0.5 + jax.random.uniform(k3, (1, C3, 1, 1), dtype=jnp.float32)
    beta3 = 0.1 * jax.random.normal(k4, (1, C3, 1, 1), dtype=jnp.float32)
    y3 = jax.block_until_ready(group_norm_pallas(x3, gamma3, beta3, G3, eps=1e-5))
    y3_ref = group_norm_ref(x3, gamma3, beta3, G3, eps=1e-5)
    assert y3.dtype == jnp.bfloat16
    assert jnp.allclose(y3.astype(jnp.float32), y3_ref.astype(jnp.float32),
                        atol=8e-2, rtol=5e-2), "mismatch (bf16 / channel path)"

    print("KERNEL_OK")
</pallas_src>

<mosaic_0001>
module attributes {stable_mosaic.version = 11 : i64} {
  func.func @_gn_rows_kernel(%arg0: i32, %arg1: memref<4x512xf32, #tpu.memory_space<vmem>>, %arg2: memref<4x512xf32, #tpu.memory_space<vmem>>, %arg3: memref<4x512xf32, #tpu.memory_space<vmem>>, %arg4: memref<4x512xf32, #tpu.memory_space<vmem>>) attributes {dimension_semantics = [#tpu.dimension_semantics<parallel>], iteration_bounds = array<i64: 1>, scalar_prefetch = 0 : i64, scratch_operands = 0 : i64, tpu.core_type = #tpu.core_type<tc>, window_params = [{transform_indices = @transform_0, window_bounds = array<i64: 4, 512>}, {pipeline_mode = #tpu.pipeline_mode<synchronous>, transform_indices = @transform_1, window_bounds = array<i64: 4, 512>}, {pipeline_mode = #tpu.pipeline_mode<synchronous>, transform_indices = @transform_2, window_bounds = array<i64: 4, 512>}, {transform_indices = @transform_3, window_bounds = array<i64: 4, 512>}]} {
    %c0 = arith.constant 0 : index
    %c0_0 = arith.constant 0 : index
    %0 = vector.load %arg1[%c0, %c0_0] : memref<4x512xf32, #tpu.memory_space<vmem>>, vector<4x512xf32>
    %cst = arith.constant dense<0.000000e+00> : vector<4xf32>
    %1 = vector.multi_reduction <add>, %0, %cst [1] : vector<4x512xf32> to vector<4xf32>
    %2 = vector.shape_cast %1 : vector<4xf32> to vector<4x1xf32>
    %3 = arith.mulf %0, %0 : vector<4x512xf32>
    %cst_1 = arith.constant dense<0.000000e+00> : vector<4xf32>
    %4 = vector.multi_reduction <add>, %3, %cst_1 [1] : vector<4x512xf32> to vector<4xf32>
    %5 = vector.shape_cast %4 : vector<4xf32> to vector<4x1xf32>
    %cst_2 = arith.constant 0.001953125 : f32
    %6 = vector.broadcast %cst_2 : f32 to vector<4x1xf32>
    %7 = arith.mulf %2, %6 : vector<4x1xf32>
    %cst_3 = arith.constant 0.001953125 : f32
    %8 = vector.broadcast %cst_3 : f32 to vector<4x1xf32>
    %9 = arith.mulf %5, %8 : vector<4x1xf32>
    %10 = arith.mulf %7, %7 : vector<4x1xf32>
    %11 = arith.subf %9, %10 : vector<4x1xf32>
    %cst_4 = arith.constant 0.000000e+00 : f32
    %12 = vector.broadcast %cst_4 : f32 to vector<4x1xf32>
    %13 = arith.maximumf %11, %12 : vector<4x1xf32>
    %cst_5 = arith.constant 9.99999974E-6 : f32
    %14 = vector.broadcast %cst_5 : f32 to vector<4x1xf32>
    %15 = arith.addf %13, %14 : vector<4x1xf32>
    %16 = math.rsqrt %15 : vector<4x1xf32>
    %17 = vector.broadcast %7 : vector<4x1xf32> to vector<4x512xf32>
    %18 = arith.subf %0, %17 : vector<4x512xf32>
    %19 = vector.broadcast %16 : vector<4x1xf32> to vector<4x512xf32>
    %20 = arith.mulf %18, %19 : vector<4x512xf32>
    %c0_6 = arith.constant 0 : index
    %c0_7 = arith.constant 0 : index
    %21 = vector.load %arg2[%c0_6, %c0_7] : memref<4x512xf32, #tpu.memory_space<vmem>>, vector<4x512xf32>
    %22 = arith.mulf %20, %21 : vector<4x512xf32>
    %c0_8 = arith.constant 0 : index
    %c0_9 = arith.constant 0 : index
    %23 = vector.load %arg3[%c0_8, %c0_9] : memref<4x512xf32, #tpu.memory_space<vmem>>, vector<4x512xf32>
    %24 = arith.addf %22, %23 : vector<4x512xf32>
    %c0_10 = arith.constant 0 : index
    %c0_11 = arith.constant 0 : index
    %25 = vector.load %arg4[%c0_10, %c0_11] : memref<4x512xf32, #tpu.memory_space<vmem>>, vector<4x512xf32>
    tpu.vector_store %arg4[%c0_10, %c0_11], %24 {strides = array<i32>} : memref<4x512xf32, #tpu.memory_space<vmem>>, vector<4x512xf32>,
    return
  }
  func.func @transform_0(%arg0: i32) -> (i32, i32) {
    %c0_i32 = arith.constant 0 : i32
    %c0_i32_0 = arith.constant 0 : i32
    return %arg0, %c0_i32 : i32, i32
  }
  func.func @transform_1(%arg0: i32) -> (i32, i32) {
    %c0_i32 = arith.constant 0 : i32
    %c0_i32_0 = arith.constant 0 : i32
    %c0_i32_1 = arith.constant 0 : i32
    return %c0_i32, %c0_i32_0 : i32, i32
  }
  func.func @transform_2(%arg0: i32) -> (i32, i32) {
    %c0_i32 = arith.constant 0 : i32
    %c0_i32_0 = arith.constant 0 : i32
    %c0_i32_1 = arith.constant 0 : i32
    return %c0_i32, %c0_i32_0 : i32, i32
  }
  func.func @transform_3(%arg0: i32) -> (i32, i32) {
    %c0_i32 = arith.constant 0 : i32
    %c0_i32_0 = arith.constant 0 : i32
    return %arg0, %c0_i32 : i32, i32
  }
}

</mosaic_0001>

<llo_original>
// kernel: tpu_custom_call.1
$region0: #{tpu_custom_call.1}
  #allocation0 [shape = 'u32[]', space=smem, size = 0x4, offset = 0x4, fixed_abs, tag = 'smem constant byte address 0x4 - core index']
  #allocation1 [shape = 'u32[144,128]{1,0:T(1,128)}', space=vmem, size = 0x12000, scoped, tag = 'internal scratch']
  %s0 = inlined_call_operand.hbm [shape: f32[4,512], index: 0, kind: input, shape index: {}]
  %s1 = inlined_call_operand.hbm [shape: f32[4,512], index: 1, kind: input, shape index: {}]
  %s2 = inlined_call_operand.hbm [shape: f32[4,512], index: 2, kind: input, shape index: {}]
  %s3 = inlined_call_operand.hbm [shape: f32[4,512], index: 3, kind: output, shape index: {}]
  %s4 = sld [smem:[#allocation0]]
  $region34: #{tpu_custom_call.1} parent=0
    _
  %s6 = ssub.s32 1, %s4
  %s7 = scalar_select 0, %s6, %s4
  $region1: #{tpu_custom_call.1} parent=0
    #allocation2 [shape = 'u8[8192]{0}', space=vmem, size = 0x2000, scoped, tag = 'input window, operand 0, single buffered']
    #allocation3 [shape = 's32[1]{0}', space=sflag, size = 0x4, scoped, tag = 'scoped memory for tpu_custom_call.1']
    #allocation4 [shape = 's32[1]{0}', space=sflag, size = 0x4, scoped, tag = 'scoped memory for tpu_custom_call.1']
    #allocation5 [shape = 'u8[8192]{0}', space=vmem, size = 0x2000, scoped, tag = 'input window, operand 1, single buffered']
    #allocation6 [shape = 's32[1]{0}', space=sflag, size = 0x4, scoped, tag = 'scoped memory for tpu_custom_call.1']
    #allocation7 [shape = 'u8[8192]{0}', space=vmem, size = 0x2000, scoped, tag = 'input window, operand 2, single buffered']
    #allocation8 [shape = 'u8[8192]{0}', space=vmem, size = 0x2000, scoped, tag = 'output window, operand 0, single buffered']
    %8 = vsyncpa [#allocation3], 0
    %9 = vsyncpa [#allocation6], 0
    %10 = vsyncpa [#allocation4], 0
    // Predicated region
    $region2: #{tpu_custom_call.1} parent=1 // pred_check
      _
    $region3: #{tpu_custom_call.1} parent=1 // pred_check_branch
      %12 = sbr.rel (0) target = $region5
    $region4: #{tpu_custom_call.1} parent=1 // pred_region
      %s14 = ssub.s32 256, 256
      %15 = vsyncadd [#allocation3], %s14
      %s17 = sshll.u32 [#allocation2], 4
      %s18 = int_to_ptr.vmem [resolvable:$true] %s17
      %20 = dma.hbm_to_vmem [thread:$0]  %s0, 256, %s18, [#allocation3]
    $region5: #{tpu_custom_call.1} parent=1 // pred_fallthru
      _
    // Predicated region
    $region6: #{tpu_custom_call.1} parent=1 // pred_check
      _
    $region7: #{tpu_custom_call.1} parent=1 // pred_check_branch
      %22 = sbr.rel (0) target = $region9
    $region8: #{tpu_custom_call.1} parent=1 // pred_region
      %s24 = ssub.s32 256, 256
      %25 = vsyncadd [#allocation6], %s24
      %s27 = sshll.u32 [#allocation5], 4
      %s28 = int_to_ptr.vmem [resolvable:$true] %s27
      %30 = dma.hbm_to_vmem [thread:$0]  %s1, 256, %s28, [#allocation6]
    $region9: #{tpu_custom_call.1} parent=1 // pred_fallthru
      _
    // Predicated region
    $region10: #{tpu_custom_call.1} parent=1 // pred_check
      _
    $region11: #{tpu_custom_call.1} parent=1 // pred_check_branch
      %32 = sbr.rel (0) target = $region13
    $region12: #{tpu_custom_call.1} parent=1 // pred_region
      %s34 = ssub.s32 256, 256
      %35 = vsyncadd [#allocation6], %s34
      %s37 = sshll.u32 [#allocation7], 4
      %s38 = int_to_ptr.vmem [resolvable:$true] %s37
      %40 = dma.hbm_to_vmem [thread:$0]  %s2, 256, %s38, [#allocation6]
    $region13: #{tpu_custom_call.1} parent=1 // pred_fallthru
      _
    // Predicated region
    $region14: #{tpu_custom_call.1} parent=1 // pred_check
      _
    $region15: #{tpu_custom_call.1} parent=1 // pred_check_branch
      %42 = sbr.rel (0) target = $region17
    $region16: #{tpu_custom_call.1} parent=1 // pred_region
      %43 = dma.done [#allocation3], 256
    $region17: #{tpu_custom_call.1} parent=1 // pred_fallthru
      _
    // Predicated region
    $region18: #{tpu_custom_call.1} parent=1 // pred_check
      _
    $region19: #{tpu_custom_call.1} parent=1 // pred_check_branch
      %45 = sbr.rel (0) target = $region21
    $region20: #{tpu_custom_call.1} parent=1 // pred_region
      %46 = dma.done [#allocation6], 256
    $region21: #{tpu_custom_call.1} parent=1 // pred_fallthru
      _
    // Predicated region
    $region22: #{tpu_custom_call.1} parent=1 // pred_check
      _
    $region23: #{tpu_custom_call.1} parent=1 // pred_check_branch
      %48 = sbr.rel (0) target = $region25
    $region24: #{tpu_custom_call.1} parent=1 // pred_region
      %49 = dma.done [#allocation6], 256
    $region25: #{tpu_custom_call.1} parent=1 // pred_fallthru
      _
    %v50 = vld [vmem:[#allocation2] sm:$0xff]
    %v51 = vld [vmem:[#allocation2 + $0x8] sm:$0xff]
    %v54 = vcombine.high %v50, %v50
    %v55 = vcombine.high %v51, %v51
    %vm58 = vcmask 1043456
    %v59 = vsel %vm58, %v50, 0.0
    %v60 = vsel %vm58, %v54, 0.0
    %v61 = vadd.f32 %v59, %v60
    %v62 = vsel %vm58, %v51, 0.0
    %v63 = vadd.f32 %v61, %v62
    %v64 = vsel %vm58, %v55, 0.0
    %v65 = vadd.f32 %v63, %v64
    %66 = vadd.xlane.f32.xlu0 %v65
    %v67 = vpop.xlane.xlu0 %66
    %v68 = vmul.f32 %v50, %v50
    %v69 = vmul.f32 %v51, %v51
    %v72 = vcombine.high %v68, %v68
    %v73 = vcombine.high %v69, %v69
    %v76 = vsel %vm58, %v68, 0.0
    %v77 = vsel %vm58, %v72, 0.0
    %v78 = vadd.f32 %v76, %v77
    %v79 = vsel %vm58, %v69, 0.0
    %v80 = vadd.f32 %v78, %v79
    %v81 = vsel %vm58, %v73, 0.0
    %v82 = vadd.f32 %v80, %v81
    %83 = vadd.xlane.f32.xlu0 %v82
    %v84 = vpop.xlane.xlu0 %83
    %v85 = vmul.f32 %v67, 0.001953125
    %v86 = vmul.f32 %v84, 0.001953125
    %v87 = vmul.f32 %v85, %v85
    %v88 = vsub.f32 %v86, %v87
    %v89 = vmax.f32 %v88, 0.0
    %v90 = vadd.f32 %v89, 1e-05
    %v91 = vrsqrt.pop %v90
    %v94 = vunpack.c.l.s4 839922192
    %v95 = vunpack.c.0.s8 %v94
    %v96 = vlaneseq
    %v97 = vshrl.u32 %v96, 7
    %v98 = vsub.s32 %v95, %v97
    %v99 = vrot.slane %v85, %v98
    %v101 = vsub.f32 %v50, %v99
    %v102 = vsub.f32 %v51, %v99
    %v105 = vunpack.c.l.s4 839922192
    %v106 = vunpack.c.0.s8 %v105
    %v107 = vlaneseq
    %v108 = vshrl.u32 %v107, 7
    %v109 = vsub.s32 %v106, %v108
    %v110 = vrot.slane %v91, %v109
    %v112 = vmul.f32 %v101, %v110
    %v113 = vmul.f32 %v102, %v110
    %v114 = vld [vmem:[#allocation5] sm:$0xff]
    %v115 = vld [vmem:[#allocation5 + $0x8] sm:$0xff]
    %v116 = vmul.f32 %v112, %v114
    %v117 = vmul.f32 %v113, %v115
    %v118 = vld [vmem:[#allocation7] sm:$0xff]
    %v119 = vld [vmem:[#allocation7 + $0x8] sm:$0xff]
    %v120 = vadd.f32 %v116, %v118
    %v121 = vadd.f32 %v117, %v119
    %122 = vst [vmem:[#allocation8] sm:$0xff] %v120
    %123 = vst [vmem:[#allocation8 + $0x8] sm:$0xff] %v121
    // Predicated region
    $region26: #{tpu_custom_call.1} parent=1 // pred_check
      _
    $region27: #{tpu_custom_call.1} parent=1 // pred_check_branch
      %125 = sbr.rel (0) target = $region29
    $region28: #{tpu_custom_call.1} parent=1 // pred_region
      %s127 = ssub.s32 256, 256
      %128 = vsyncadd [#allocation4], %s127
      %s130 = sshll.u32 [#allocation8], 4
      %s131 = int_to_ptr.vmem [resolvable:$true] %s130
      %133 = dma.vmem_to_hbm [thread:$0]  %s131, 256, %s3, [#allocation4]
    $region29: #{tpu_custom_call.1} parent=1 // pred_fallthru
      _
    // Predicated region
    $region30: #{tpu_custom_call.1} parent=1 // pred_check
      _
    $region31: #{tpu_custom_call.1} parent=1 // pred_check_branch
      %135 = sbr.rel (0) target = $region33
    $region32: #{tpu_custom_call.1} parent=1 // pred_region
      %136 = dma.done [#allocation4], 256
    $region33: #{tpu_custom_call.1} parent=1 // pred_fallthru
      _
    %137 = vsyncpa [#allocation3], 1
    %138 = vsyncpa [#allocation6], 1
    %139 = vsyncpa [#allocation4], 1

</llo_original>
